<compile_context>
chip_gen: v6e
topology: v6e:2x2x1
jax: 0.10.0
libtpu: 0.0.40
codegen_flags: <defaults>
</compile_context>

<pallas_src>
import jax
import jax.numpy as jnp
from jax.experimental import pallas as pl
from jax.experimental.pallas import tpu as pltpu


def _round_up(x, m):
    return ((x + m - 1) // m) * m


# ---------------------------------------------------------------------------
# Kernel: fused fc1 -> ReLU -> fc2 -> ReLU -> fc3 on one batch tile.
# ---------------------------------------------------------------------------
def _dqn_kernel(x_ref, w1_ref, b1_ref, w2_ref, b2_ref, w3_ref, b3_ref, o_ref):
    # x_ref: (tile_b, state_dim) bf16; w*: bf16; b*: f32.
    # fc1 + ReLU  (bf16 MXU matmul, f32 accumulation; elementwise in f32)
    h1 = jnp.dot(x_ref[...], w1_ref[...], preferred_element_type=jnp.float32)
    h1 = jnp.maximum(h1 + b1_ref[...], 0.0)
    # fc2 + ReLU
    h2 = jnp.dot(h1.astype(w2_ref.dtype), w2_ref[...],
                 preferred_element_type=jnp.float32)
    h2 = jnp.maximum(h2 + b2_ref[...], 0.0)
    # fc3 (no activation; output columns are pre-padded to a multiple of 128)
    o = jnp.dot(h2.astype(w3_ref.dtype), w3_ref[...],
                preferred_element_type=jnp.float32)
    o_ref[...] = (o + b3_ref[...]).astype(o_ref.dtype)


# ---------------------------------------------------------------------------
# One-time parameter preparation (hoisted out of the per-call forward path).
# ---------------------------------------------------------------------------
def prepare_params(params, out_dim):
    """Pad fc3 columns to a multiple of 128 (lane-dense output stores), cast
    weights to bf16 (native MXU dtype, halves weight HBM streaming), keep
    biases f32 (elementwise adds stay f32; v5e has no bf16 VPU)."""
    w1, b1, w2, b2, w3, b3 = params
    out_dim_p = _round_up(out_dim, 128)
    if out_dim_p != out_dim:
        w3 = jnp.pad(w3, ((0, 0), (0, out_dim_p - out_dim)))
        b3 = jnp.pad(b3, ((0, 0), (0, out_dim_p - out_dim)))
    return (w1.astype(jnp.bfloat16), b1.astype(jnp.float32),
            w2.astype(jnp.bfloat16), b2.astype(jnp.float32),
            w3.astype(jnp.bfloat16), b3.astype(jnp.float32))


def _choose_batch_tile(B, max_tile):
    """Pick tile_b so that (a) per-step MXU work amortises the ~0.35 us
    grid-step overhead, (b) batch padding waste is <8 rows, and (c) there are
    >=2 balanced grid steps when the batch is big enough, so the 'parallel'
    batch axis actually feeds both v7x TensorCores."""
    B8 = _round_up(max(B, 1), 8)
    n_steps = max(1, -(-B8 // max_tile))
    if n_steps == 1 and B8 >= 1024:      # enough work to split across 2 TCs
        n_steps = 2
    tile_b = _round_up(-(-B8 // n_steps), 8)
    return tile_b, n_steps


# ---------------------------------------------------------------------------
# Forward pass.
# ---------------------------------------------------------------------------
def dqn_forward(state, prepared_params, num_nodes, num_actions_per_node,
                num_objectives, *, batch_tile=2048, out_dtype=jnp.float32):
    """state: (B, state_dim) float32.  prepared_params: output of
    prepare_params().  Returns (B, num_nodes, num_actions_per_node,
    num_objectives) in out_dtype (f32 by default for module parity)."""
    w1, b1, w2, b2, w3, b3 = prepared_params
    B, state_dim = state.shape
    out_dim = num_nodes * num_actions_per_node * num_objectives
    out_dim_p = w3.shape[1]
    h1_dim, h2_dim = w1.shape[1], w2.shape[1]

    # ---- batch tiling ----
    tile_b, n_steps = _choose_batch_tile(B, batch_tile)
    B_p = tile_b * n_steps
    x = state.astype(jnp.bfloat16)
    if B_p != B:
        x = jnp.pad(x, ((0, B_p - B), (0, 0)))

    grid = (n_steps,)

    def resident(a):
        # Whole-array block, constant index map -> stays VMEM-resident.
        return pl.BlockSpec(a.shape, lambda i, _nd=a.ndim: (0,) * _nd)

    out_bytes = jnp.dtype(out_dtype).itemsize
    flops = 2 * B_p * (state_dim * h1_dim + h1_dim * h2_dim + h2_dim * out_dim_p)
    bytes_accessed = (
        x.size * 2 + w1.size * 2 + w2.size * 2 + w3.size * 2
        + b1.size * 4 + b2.size * 4 + b3.size * 4
        + B_p * out_dim_p * out_bytes)

    # Rough per-step VMEM footprint: double-buffered x/out tiles, f32
    # intermediates, double-buffered resident weights/biases.
    vmem_est = (
        2 * tile_b * state_dim * 2
        + 2 * tile_b * out_dim_p * out_bytes
        + tile_b * (h1_dim + h2_dim + out_dim_p) * 4
        + 2 * (w1.size + w2.size + w3.size) * 2
        + 2 * (b1.size + b2.size + b3.size) * 4)
    # 32 MiB floor (>= default on v6e/v7x, raises v5e's 16 MiB default),
    # 48 MiB ceiling (safe under v7x's 64 MiB physical VMEM).
    vmem_limit = int(min(48 << 20, max(32 << 20, vmem_est * 1.5 + (4 << 20))))

    flat = pl.pallas_call(
        _dqn_kernel,
        out_shape=jax.ShapeDtypeStruct((B_p, out_dim_p), out_dtype),
        grid=grid,
        in_specs=[
            pl.BlockSpec((tile_b, state_dim), lambda i: (i, 0)),  # activations
            resident(w1), resident(b1),
            resident(w2), resident(b2),
            resident(w3), resident(b3),
        ],
        out_specs=pl.BlockSpec((tile_b, out_dim_p), lambda i: (i, 0)),
        compiler_params=pltpu.CompilerParams(
            dimension_semantics=("parallel",),
            vmem_limit_bytes=vmem_limit),
        cost_estimate=pl.CostEstimate(
            flops=flops, transcendentals=0, bytes_accessed=bytes_accessed),
    )(x, w1, b1, w2, b2, w3, b3)

    out = flat[:B, :out_dim]
    return out.reshape(B, num_nodes, num_actions_per_node, num_objectives)


# ---------------------------------------------------------------------------
# Init + reference.
# ---------------------------------------------------------------------------
def init_params(key, state_dim, num_nodes, num_actions_per_node, num_objectives):
    """Deterministic init mimicking PyTorch nn.Linear default U(-1/sqrt(fan_in), +)."""
    out_dim = num_nodes * num_actions_per_node * num_objectives
    dims = [(state_dim, 512), (512, 256), (256, out_dim)]
    params = []
    for i, (fan_in, fan_out) in enumerate(dims):
        kw, kb = jax.random.split(jax.random.fold_in(key, i))
        bound = 1.0 / (fan_in ** 0.5)
        w = jax.random.uniform(kw, (fan_in, fan_out), jnp.float32, -bound, bound)
        b = jax.random.uniform(kb, (1, fan_out), jnp.float32, -bound, bound)
        params += [w, b]
    return tuple(params)


def _reference(state, params, num_nodes, num_actions_per_node, num_objectives):
    """Plain-JAX reference mirroring the kernel's bf16-matmul / f32-accumulate path."""
    w1, b1, w2, b2, w3, b3 = params
    x = state.astype(jnp.bfloat16)
    h = jnp.dot(x, w1.astype(jnp.bfloat16),
                preferred_element_type=jnp.float32) + b1
    h = jnp.maximum(h, 0.0)
    h = jnp.dot(h.astype(jnp.bfloat16), w2.astype(jnp.bfloat16),
                preferred_element_type=jnp.float32) + b2
    h = jnp.maximum(h, 0.0)
    o = jnp.dot(h.astype(jnp.bfloat16), w3.astype(jnp.bfloat16),
                preferred_element_type=jnp.float32) + b3
    return o.reshape(state.shape[0], num_nodes, num_actions_per_node,
                     num_objectives)


if __name__ == "__main__":
    # Small, module-consistent shapes.
    batch = 2
    state_dim = 32
    num_nodes = 4
    num_actions_per_node = 3
    num_objectives = 4

    key = jax.random.PRNGKey(0)
    k_state, k_params = jax.random.split(key)
    state = jax.random.normal(k_state, (batch, state_dim), jnp.float32)
    params = init_params(k_params, state_dim, num_nodes,
                         num_actions_per_node, num_objectives)
    out_dim = num_nodes * num_actions_per_node * num_objectives

    # One-time weight prep (bf16 cast + lane padding), hoisted out of forward.
    prepared = prepare_params(params, out_dim)

    out = dqn_forward(state, prepared, num_nodes, num_actions_per_node,
                      num_objectives)
    out = jax.block_until_ready(out)

    ref = _reference(state, params, num_nodes, num_actions_per_node,
                     num_objectives)
    assert out.shape == (batch, num_nodes, num_actions_per_node, num_objectives)
    assert jnp.allclose(out, ref, atol=1e-3, rtol=1e-3)

    print("KERNEL_OK")
</pallas_src>

<mosaic_0001>
module attributes {stable_mosaic.version = 11 : i64} {
  func.func @_dqn_kernel(%arg0: i32, %arg1: memref<8x32xbf16, #tpu.memory_space<vmem>>, %arg2: memref<32x512xbf16, #tpu.memory_space<vmem>>, %arg3: memref<1x512xf32, #tpu.memory_space<vmem>>, %arg4: memref<512x256xbf16, #tpu.memory_space<vmem>>, %arg5: memref<1x256xf32, #tpu.memory_space<vmem>>, %arg6: memref<256x128xbf16, #tpu.memory_space<vmem>>, %arg7: memref<1x128xf32, #tpu.memory_space<vmem>>, %arg8: memref<8x128xf32, #tpu.memory_space<vmem>>) attributes {dimension_semantics = [#tpu.dimension_semantics<parallel>], iteration_bounds = array<i64: 1>, scalar_prefetch = 0 : i64, scratch_operands = 0 : i64, tpu.core_type = #tpu.core_type<tc>, window_params = [{transform_indices = @transform_0, window_bounds = array<i64: 8, 32>}, {pipeline_mode = #tpu.pipeline_mode<synchronous>, transform_indices = @transform_1, window_bounds = array<i64: 32, 512>}, {pipeline_mode = #tpu.pipeline_mode<synchronous>, transform_indices = @transform_2, window_bounds = array<i64: 1, 512>}, {pipeline_mode = #tpu.pipeline_mode<synchronous>, transform_indices = @transform_3, window_bounds = array<i64: 512, 256>}, {pipeline_mode = #tpu.pipeline_mode<synchronous>, transform_indices = @transform_4, window_bounds = array<i64: 1, 256>}, {pipeline_mode = #tpu.pipeline_mode<synchronous>, transform_indices = @transform_5, window_bounds = array<i64: 256, 128>}, {pipeline_mode = #tpu.pipeline_mode<synchronous>, transform_indices = @transform_6, window_bounds = array<i64: 1, 128>}, {transform_indices = @transform_7, window_bounds = array<i64: 8, 128>}]} {
    %c0 = arith.constant 0 : index
    %c0_0 = arith.constant 0 : index
    %0 = vector.load %arg1[%c0, %c0_0] : memref<8x32xbf16, #tpu.memory_space<vmem>>, vector<8x32xbf16>
    %c0_1 = arith.constant 0 : index
    %c0_2 = arith.constant 0 : index
    %1 = vector.load %arg2[%c0_1, %c0_2] : memref<32x512xbf16, #tpu.memory_space<vmem>>, vector<32x512xbf16>
    %cst = arith.constant dense<0.000000e+00> : vector<8x512xf32>
    %2 = tpu.matmul %0, %1, %cst {dimension_numbers = #tpu.dot_dimension_numbers<[1], [0], [0], [1], [0, 0, 1, 1], [], []>} : vector<8x32xbf16>, vector<32x512xbf16>, vector<8x512xf32> -> vector<8x512xf32>
    %c0_3 = arith.constant 0 : index
    %c0_4 = arith.constant 0 : index
    %3 = vector.load %arg3[%c0_3, %c0_4] : memref<1x512xf32, #tpu.memory_space<vmem>>, vector<1x512xf32>
    %4 = vector.broadcast %3 : vector<1x512xf32> to vector<8x512xf32>
    %5 = arith.addf %2, %4 : vector<8x512xf32>
    %cst_5 = arith.constant 0.000000e+00 : f32
    %6 = vector.broadcast %cst_5 : f32 to vector<8x512xf32>
    %7 = arith.maximumf %5, %6 : vector<8x512xf32>
    %8 = arith.truncf %7 : vector<8x512xf32> to vector<8x512xbf16>
    %c0_6 = arith.constant 0 : index
    %c0_7 = arith.constant 0 : index
    %9 = vector.load %arg4[%c0_6, %c0_7] : memref<512x256xbf16, #tpu.memory_space<vmem>>, vector<512x256xbf16>
    %cst_8 = arith.constant dense<0.000000e+00> : vector<8x256xf32>
    %10 = tpu.matmul %8, %9, %cst_8 {dimension_numbers = #tpu.dot_dimension_numbers<[1], [0], [0], [1], [0, 0, 1, 1], [], []>} : vector<8x512xbf16>, vector<512x256xbf16>, vector<8x256xf32> -> vector<8x256xf32>
    %c0_9 = arith.constant 0 : index
    %c0_10 = arith.constant 0 : index
    %11 = vector.load %arg5[%c0_9, %c0_10] : memref<1x256xf32, #tpu.memory_space<vmem>>, vector<1x256xf32>
    %12 = vector.broadcast %11 : vector<1x256xf32> to vector<8x256xf32>
    %13 = arith.addf %10, %12 : vector<8x256xf32>
    %cst_11 = arith.constant 0.000000e+00 : f32
    %14 = vector.broadcast %cst_11 : f32 to vector<8x256xf32>
    %15 = arith.maximumf %13, %14 : vector<8x256xf32>
    %16 = arith.truncf %15 : vector<8x256xf32> to vector<8x256xbf16>
    %c0_12 = arith.constant 0 : index
    %c0_13 = arith.constant 0 : index
    %17 = vector.load %arg6[%c0_12, %c0_13] : memref<256x128xbf16, #tpu.memory_space<vmem>>, vector<256x128xbf16>
    %cst_14 = arith.constant dense<0.000000e+00> : vector<8x128xf32>
    %18 = tpu.matmul %16, %17, %cst_14 {dimension_numbers = #tpu.dot_dimension_numbers<[1], [0], [0], [1], [0, 0, 1, 1], [], []>} : vector<8x256xbf16>, vector<256x128xbf16>, vector<8x128xf32> -> vector<8x128xf32>
    %c0_15 = arith.constant 0 : index
    %c0_16 = arith.constant 0 : index
    %19 = vector.load %arg7[%c0_15, %c0_16] : memref<1x128xf32, #tpu.memory_space<vmem>>, vector<1x128xf32>
    %20 = vector.broadcast %19 : vector<1x128xf32> to vector<8x128xf32>
    %21 = arith.addf %18, %20 : vector<8x128xf32>
    %c0_17 = arith.constant 0 : index
    %c0_18 = arith.constant 0 : index
    %22 = vector.load %arg8[%c0_17, %c0_18] : memref<8x128xf32, #tpu.memory_space<vmem>>, vector<8x128xf32>
    tpu.vector_store %arg8[%c0_17, %c0_18], %21 {strides = array<i32>} : memref<8x128xf32, #tpu.memory_space<vmem>>, vector<8x128xf32>,
    return
  }
  func.func @transform_0(%arg0: i32) -> (i32, i32) {
    %c0_i32 = arith.constant 0 : i32
    %c0_i32_0 = arith.constant 0 : i32
    return %arg0, %c0_i32 : i32, i32
  }
  func.func @transform_1(%arg0: i32) -> (i32, i32) {
    %c0_i32 = arith.constant 0 : i32
    %c0_i32_0 = arith.constant 0 : i32
    %c0_i32_1 = arith.constant 0 : i32
    return %c0_i32, %c0_i32_0 : i32, i32
  }
  func.func @transform_2(%arg0: i32) -> (i32, i32) {
    %c0_i32 = arith.constant 0 : i32
    %c0_i32_0 = arith.constant 0 : i32
    %c0_i32_1 = arith.constant 0 : i32
    return %c0_i32, %c0_i32_0 : i32, i32
  }
  func.func @transform_3(%arg0: i32) -> (i32, i32) {
    %c0_i32 = arith.constant 0 : i32
    %c0_i32_0 = arith.constant 0 : i32
    %c0_i32_1 = arith.constant 0 : i32
    return %c0_i32, %c0_i32_0 : i32, i32
  }
  func.func @transform_4(%arg0: i32) -> (i32, i32) {
    %c0_i32 = arith.constant 0 : i32
    %c0_i32_0 = arith.constant 0 : i32
    %c0_i32_1 = arith.constant 0 : i32
    return %c0_i32, %c0_i32_0 : i32, i32
  }
  func.func @transform_5(%arg0: i32) -> (i32, i32) {
    %c0_i32 = arith.constant 0 : i32
    %c0_i32_0 = arith.constant 0 : i32
    %c0_i32_1 = arith.constant 0 : i32
    return %c0_i32, %c0_i32_0 : i32, i32
  }
  func.func @transform_6(%arg0: i32) -> (i32, i32) {
    %c0_i32 = arith.constant 0 : i32
    %c0_i32_0 = arith.constant 0 : i32
    %c0_i32_1 = arith.constant 0 : i32
    return %c0_i32, %c0_i32_0 : i32, i32
  }
  func.func @transform_7(%arg0: i32) -> (i32, i32) {
    %c0_i32 = arith.constant 0 : i32
    %c0_i32_0 = arith.constant 0 : i32
    return %arg0, %c0_i32 : i32, i32
  }
}

</mosaic_0001>

<llo_original>
// kernel: tpu_custom_call.1
$region0: #{tpu_custom_call.1}
  #allocation0 [shape = 'u32[]', space=smem, size = 0x4, offset = 0x4, fixed_abs, tag = 'smem constant byte address 0x4 - core index']
  #allocation1 [shape = 'u32[144,128]{1,0:T(1,128)}', space=vmem, size = 0x12000, scoped, tag = 'internal scratch']
  %s0 = inlined_call_operand.hbm [shape: bf16[8,32], index: 0, kind: input, shape index: {}]
  %s1 = inlined_call_operand.hbm [shape: bf16[32,512], index: 1, kind: input, shape index: {}]
  %s2 = inlined_call_operand.hbm [shape: f32[1,512], index: 2, kind: input, shape index: {}]
  %s3 = inlined_call_operand.hbm [shape: bf16[512,256], index: 3, kind: input, shape index: {}]
  %s4 = inlined_call_operand.vmem [shape: f32[1,256], index: 4, kind: input, shape index: {}]
  %s5 = inlined_call_operand.hbm [shape: bf16[256,128], index: 5, kind: input, shape index: {}]
  %s6 = inlined_call_operand.vmem [shape: f32[1,128], index: 6, kind: input, shape index: {}]
  %s7 = inlined_call_operand.hbm [shape: f32[8,128], index: 7, kind: output, shape index: {}]
  %s8 = sld [smem:[#allocation0]]
  $region58: #{tpu_custom_call.1} parent=0
    _
  %s10 = ssub.s32 1, %s8
  %s11 = scalar_select 0, %s10, %s8
  $region1: #{tpu_custom_call.1} parent=0
    #allocation2 [shape = 'u8[2048]{0}', space=vmem, size = 0x800, scoped, tag = 'input window, operand 0, single buffered']
    #allocation3 [shape = 's32[1]{0}', space=sflag, size = 0x4, scoped, tag = 'scoped memory for tpu_custom_call.1']
    #allocation4 [shape = 's32[1]{0}', space=sflag, size = 0x4, scoped, tag = 'scoped memory for tpu_custom_call.1']
    #allocation5 [shape = 'u8[32768]{0}', space=vmem, size = 0x8000, scoped, tag = 'input window, operand 1, single buffered']
    #allocation6 [shape = 's32[1]{0}', space=sflag, size = 0x4, scoped, tag = 'scoped memory for tpu_custom_call.1']
    #allocation7 [shape = 'u8[2048]{0}', space=vmem, size = 0x800, scoped, tag = 'input window, operand 2, single buffered']
    #allocation8 [shape = 'u8[262144]{0}', space=vmem, size = 0x40000, scoped, tag = 'input window, operand 3, single buffered']
    #allocation9 [shape = 's32[1]{0}', space=sflag, size = 0x4, scoped, tag = 'scoped memory for tpu_custom_call.1']
    #allocation10 [shape = 'u8[65536]{0}', space=vmem, size = 0x10000, scoped, tag = 'input window, operand 5, single buffered']
    #allocation11 [shape = 'u8[4096]{0}', space=vmem, size = 0x1000, scoped, tag = 'output window, operand 0, single buffered']
    %12 = vsyncpa [#allocation3], 0
    %13 = vsyncpa [#allocation6], 0
    %14 = vsyncpa [#allocation9], 0
    %15 = vsyncpa [#allocation4], 0
    // Predicated region
    $region2: #{tpu_custom_call.1} parent=1 // pred_check
      _
    $region3: #{tpu_custom_call.1} parent=1 // pred_check_branch
      %17 = sbr.rel (0) target = $region5
    $region4: #{tpu_custom_call.1} parent=1 // pred_region
      %s19 = ssub.s32 64, 64
      %20 = vsyncadd [#allocation3], %s19
      %s22 = sshll.u32 [#allocation2], 4
      %s23 = int_to_ptr.vmem [resolvable:$true] %s22
      %25 = dma.hbm_to_vmem [thread:$0]  %s0, 64, %s23, [#allocation3]
    $region5: #{tpu_custom_call.1} parent=1 // pred_fallthru
      _
    // Predicated region
    $region6: #{tpu_custom_call.1} parent=1 // pred_check
      _
    $region7: #{tpu_custom_call.1} parent=1 // pred_check_branch
      %27 = sbr.rel (0) target = $region9
    $region8: #{tpu_custom_call.1} parent=1 // pred_region
      %s29 = ssub.s32 1024, 1024
      %30 = vsyncadd [#allocation6], %s29
      %s31 = sshll.u32 [#allocation5], 4
      %s32 = int_to_ptr.vmem [resolvable:$true] %s31
      %37 = dma.hbm_to_vmem [thread:$0]  %s1, 1024, %s32, [#allocation6], 256, 256, 16
    $region9: #{tpu_custom_call.1} parent=1 // pred_fallthru
      _
    // Predicated region
    $region10: #{tpu_custom_call.1} parent=1 // pred_check
      _
    $region11: #{tpu_custom_call.1} parent=1 // pred_check_branch
      %39 = sbr.rel (0) target = $region13
    $region12: #{tpu_custom_call.1} parent=1 // pred_region
      %s41 = ssub.s32 64, 64
      %42 = vsyncadd [#allocation6], %s41
      %s44 = sshll.u32 [#allocation7], 4
      %s45 = int_to_ptr.vmem [resolvable:$true] %s44
      %47 = dma.hbm_to_vmem [thread:$0]  %s2, 64, %s45, [#allocation6]
    $region13: #{tpu_custom_call.1} parent=1 // pred_fallthru
      _
    // Predicated region
    $region14: #{tpu_custom_call.1} parent=1 // pred_check
      _
    $region15: #{tpu_custom_call.1} parent=1 // pred_check_branch
      %49 = sbr.rel (0) target = $region17
    $region16: #{tpu_custom_call.1} parent=1 // pred_region
      %s51 = ssub.s32 8192, 8192
      %52 = vsyncadd [#allocation9], %s51
      %s53 = sshll.u32 [#allocation8], 4
      %s54 = int_to_ptr.vmem [resolvable:$true] %s53
      %59 = dma.hbm_to_vmem [thread:$0]  %s3, 8192, %s54, [#allocation9], 128, 128, 8
    $region17: #{tpu_custom_call.1} parent=1 // pred_fallthru
      _
    // Predicated region
    $region18: #{tpu_custom_call.1} parent=1 // pred_check
      _
    $region19: #{tpu_custom_call.1} parent=1 // pred_check_branch
      %61 = sbr.rel (0) target = $region21
    $region20: #{tpu_custom_call.1} parent=1 // pred_region
      _
    $region21: #{tpu_custom_call.1} parent=1 // pred_fallthru
      _
    // Predicated region
    $region22: #{tpu_custom_call.1} parent=1 // pred_check
      _
    $region23: #{tpu_custom_call.1} parent=1 // pred_check_branch
      %63 = sbr.rel (0) target = $region25
    $region24: #{tpu_custom_call.1} parent=1 // pred_region
      %s65 = ssub.s32 2048, 2048
      %66 = vsyncadd [#allocation9], %s65
      %s67 = sshll.u32 [#allocation10], 4
      %s68 = int_to_ptr.vmem [resolvable:$true] %s67
      %73 = dma.hbm_to_vmem [thread:$0]  %s5, 2048, %s68, [#allocation9], 64, 64, 4
    $region25: #{tpu_custom_call.1} parent=1 // pred_fallthru
      _
    // Predicated region
    $region26: #{tpu_custom_call.1} parent=1 // pred_check
      _
    $region27: #{tpu_custom_call.1} parent=1 // pred_check_branch
      %75 = sbr.rel (0) target = $region29
    $region28: #{tpu_custom_call.1} parent=1 // pred_region
      _
    $region29: #{tpu_custom_call.1} parent=1 // pred_fallthru
      _
    // Predicated region
    $region30: #{tpu_custom_call.1} parent=1 // pred_check
      _
    $region31: #{tpu_custom_call.1} parent=1 // pred_check_branch
      %77 = sbr.rel (0) target = $region33
    $region32: #{tpu_custom_call.1} parent=1 // pred_region
      %78 = dma.done [#allocation3], 64
    $region33: #{tpu_custom_call.1} parent=1 // pred_fallthru
      _
    // Predicated region
    $region34: #{tpu_custom_call.1} parent=1 // pred_check
      _
    $region35: #{tpu_custom_call.1} parent=1 // pred_check_branch
      %80 = sbr.rel (0) target = $region37
    $region36: #{tpu_custom_call.1} parent=1 // pred_region
      %81 = dma.done [#allocation6], 1024
    $region37: #{tpu_custom_call.1} parent=1 // pred_fallthru
      _
    // Predicated region
    $region38: #{tpu_custom_call.1} parent=1 // pred_check
      _
    $region39: #{tpu_custom_call.1} parent=1 // pred_check_branch
      %83 = sbr.rel (0) target = $region41
    $region40: #{tpu_custom_call.1} parent=1 // pred_region
      %84 = dma.done [#allocation6], 64
    $region41: #{tpu_custom_call.1} parent=1 // pred_fallthru
      _
    // Predicated region
    $region42: #{tpu_custom_call.1} parent=1 // pred_check
      _
    $region43: #{tpu_custom_call.1} parent=1 // pred_check_branch
      %86 = sbr.rel (0) target = $region45
    $region44: #{tpu_custom_call.1} parent=1 // pred_region
      %87 = dma.done [#allocation9], 8192
    $region45: #{tpu_custom_call.1} parent=1 // pred_fallthru
      _
    // Predicated region
    $region46: #{tpu_custom_call.1} parent=1 // pred_check
      _
    $region47: #{tpu_custom_call.1} parent=1 // pred_check_branch
      %89 = sbr.rel (0) target = $region49
    $region48: #{tpu_custom_call.1} parent=1 // pred_region
      %90 = dma.done [#allocation9], 2048
    $region49: #{tpu_custom_call.1} parent=1 // pred_fallthru
      _
    %v92 = vld [vmem:[#allocation2] sm:$0xf]
    %v93 = vld [vmem:[#allocation5] sm:$0xff]
    %v94 = vld [vmem:[#allocation5 + $0x8] sm:$0xff]
    %v95 = vld [vmem:[#allocation5 + $0x10] sm:$0xff]
    %v96 = vld [vmem:[#allocation5 + $0x18] sm:$0xff]
    %v97 = vld [vmem:[#allocation5 + $0x20] sm:$0xff]
    %v98 = vld [vmem:[#allocation5 + $0x28] sm:$0xff]
    %v99 = vld [vmem:[#allocation5 + $0x30] sm:$0xff]
    %v100 = vld [vmem:[#allocation5 + $0x38] sm:$0xff]
    %v101 = vld [vmem:[#allocation7] sm:$0xf]
    %v103 = vlaneseq
    %v104 = vshrl.u32 %v103, 7
    %v105 = vsub.s32 0, %v104
    %v106 = vrot.slane %v101, %v105
    %v107 = vlaneseq
    %v108 = vshrl.u32 %v107, 7
    %v109 = vsub.s32 1, %v108
    %v110 = vrot.slane %v101, %v109
    %v111 = vlaneseq
    %v112 = vshrl.u32 %v111, 7
    %v113 = vsub.s32 2, %v112
    %v114 = vrot.slane %v101, %v113
    %v115 = vlaneseq
    %v116 = vshrl.u32 %v115, 7
    %v117 = vsub.s32 3, %v116
    %v118 = vrot.slane %v101, %v117
    %v131 = vunpack.c.l.b16 %v93
    %v132 = vunpack.c.h.b16 %v93
    %v133 = vunpack.c.l.b16 %v94
    %v134 = vunpack.c.h.b16 %v94
    %v135 = vunpack.c.l.b16 %v95
    %v136 = vunpack.c.h.b16 %v95
    %v137 = vunpack.c.l.b16 %v96
    %v138 = vunpack.c.h.b16 %v96
    %v139 = vunpack.c.l.b16 %v97
    %v140 = vunpack.c.h.b16 %v97
    %v141 = vunpack.c.l.b16 %v98
    %v142 = vunpack.c.h.b16 %v98
    %v143 = vunpack.c.l.b16 %v99
    %v144 = vunpack.c.h.b16 %v99
    %v145 = vunpack.c.l.b16 %v100
    %v146 = vunpack.c.h.b16 %v100
    %v147 = vpack.c.b16 %v135, %v131
    %v148 = vpack.c.b16 %v136, %v132
    %v149 = vpack.c.b16 %v137, %v133
    %v150 = vpack.c.b16 %v138, %v134
    %v151 = vpack.c.b16 %v143, %v139
    %v152 = vpack.c.b16 %v144, %v140
    %v153 = vpack.c.b16 %v145, %v141
    %v154 = vpack.c.b16 %v146, %v142
    %vm163 = vcmask 261120
    %v165 = vsel %vm163, %v92, 0
    %167 = vmatprep.subr.bf16.mxu0 0
    %168 = vmatpush1.bf16.msra.mxu0 0
    %169 = vmatprep.subr.bf16.mxu0 0
    %170 = vmatpush1.bf16.msra.mxu0 0
    %171 = vmatprep.subr.bf16.mxu0 0
    %172 = vmatpush1.bf16.msra.mxu0 0
    %173 = vmatprep.subr.bf16.mxu0 0
    %174 = vmatpush1.bf16.msra.mxu0 0
    %175 = vmatprep.subr.bf16.mxu0 0
    %176 = vmatpush1.bf16.msra.mxu0 0
    %177 = vmatprep.subr.bf16.mxu0 0
    %178 = vmatpush1.bf16.msra.mxu0 0
    %179 = vmatprep.subr.bf16.mxu0 %v152
    %180 = vmatpush1.bf16.msra.mxu0 %v151
    %181 = vmatprep.subr.bf16.mxu0 %v148
    %182 = vmatpush1.bf16.msra.mxu0 %v147
    %183 = vmatprep.subr.bf16.mxu0 0
    %184 = vmatpush2.bf16.msra.mxu0 0
    %185 = vmatprep.subr.bf16.mxu0 0
    %186 = vmatpush2.bf16.msra.mxu0 0
    %187 = vmatprep.subr.bf16.mxu0 0
    %188 = vmatpush2.bf16.msra.mxu0 0
    %189 = vmatprep.subr.bf16.mxu0 0
    %190 = vmatpush2.bf16.msra.mxu0 0
    %191 = vmatprep.subr.bf16.mxu0 0
    %192 = vmatpush2.bf16.msra.mxu0 0
    %193 = vmatprep.subr.bf16.mxu0 0
    %194 = vmatpush2.bf16.msra.mxu0 0
    %195 = vmatprep.subr.bf16.mxu0 0
    %196 = vmatpush2.bf16.msra.mxu0 0
    %197 = vmatprep.subr.bf16.mxu0 0
    %198 = vmatpush2.bf16.msra.mxu0 0
    %199 = vmatprep.mubr.bf16.mxu0 0
    %200 = vmatmul.mubr.bf16.gmra.mxu0 %v165
    %v201 = vpop.f32.mrf.mxu0
    %v202 = vadd.f32 %v106, %v201
    %v203 = vpop.f32.mrf.mxu0
    %v204 = vadd.f32 %v110, %v203
    %v205 = vpop.f32.mrf.mxu0
    %v206 = vpop.f32.mrf.mxu0
    %207 = vdwg.mxu0
    %208 = vmatprep.subr.bf16.mxu0 0
    %209 = vmatpush1.bf16.msra.mxu0 0
    %210 = vmatprep.subr.bf16.mxu0 0
    %211 = vmatpush1.bf16.msra.mxu0 0
    %212 = vmatprep.subr.bf16.mxu0 0
    %213 = vmatpush1.bf16.msra.mxu0 0
    %214 = vmatprep.subr.bf16.mxu0 0
    %215 = vmatpush1.bf16.msra.mxu0 0
    %216 = vmatprep.subr.bf16.mxu0 0
    %217 = vmatpush1.bf16.msra.mxu0 0
    %218 = vmatprep.subr.bf16.mxu0 0
    %219 = vmatpush1.bf16.msra.mxu0 0
    %220 = vmatprep.subr.bf16.mxu0 %v154
    %221 = vmatpush1.bf16.msra.mxu0 %v153
    %222 = vmatprep.subr.bf16.mxu0 %v150
    %223 = vmatpush1.bf16.msra.mxu0 %v149
    %224 = vmatprep.subr.bf16.mxu0 0
    %225 = vmatpush2.bf16.msra.mxu0 0
    %226 = vmatprep.subr.bf16.mxu0 0
    %227 = vmatpush2.bf16.msra.mxu0 0
    %228 = vmatprep.subr.bf16.mxu0 0
    %229 = vmatpush2.bf16.msra.mxu0 0
    %230 = vmatprep.subr.bf16.mxu0 0
    %231 = vmatpush2.bf16.msra.mxu0 0
    %232 = vmatprep.subr.bf16.mxu0 0
    %233 = vmatpush2.bf16.msra.mxu0 0
    %234 = vmatprep.subr.bf16.mxu0 0
    %235 = vmatpush2.bf16.msra.mxu0 0
    %236 = vmatprep.subr.bf16.mxu0 0
    %237 = vmatpush2.bf16.msra.mxu0 0
    %238 = vmatprep.subr.bf16.mxu0 0
    %239 = vmatpush2.bf16.msra.mxu0 0
    %240 = vmatprep.mubr.bf16.mxu0 0
    %241 = vmatmul.mubr.bf16.gmra.mxu0 %v165
    %v242 = vpop.f32.mrf.mxu0
    %v243 = vadd.f32 %v114, %v242
    %v244 = vpop.f32.mrf.mxu0
    %v245 = vadd.f32 %v118, %v244
    %v246 = vpop.f32.mrf.mxu0
    %v247 = vpop.f32.mrf.mxu0
    %248 = vdwg.mxu0
    %v249 = vmax.f32 %v202, 0.0
    %v250 = vmax.f32 %v204, 0.0
    %v251 = vmax.f32 %v243, 0.0
    %v252 = vmax.f32 %v245, 0.0
    %v253 = vpack.c.bf16 %v249, %v249
    %v254 = vpack.c.bf16 %v250, %v250
    %v255 = vpack.c.bf16 %v251, %v251
    %v256 = vpack.c.bf16 %v252, %v252
    %v257 = vld [vmem:[#allocation8] sm:$0xff]
    %v258 = vld [vmem:[#allocation8 + $0x8] sm:$0xff]
    %v259 = vld [vmem:[#allocation8 + $0x10] sm:$0xff]
    %v260 = vld [vmem:[#allocation8 + $0x18] sm:$0xff]
    %v261 = vld [vmem:[#allocation8 + $0x20] sm:$0xff]
    %v262 = vld [vmem:[#allocation8 + $0x28] sm:$0xff]
    %v263 = vld [vmem:[#allocation8 + $0x30] sm:$0xff]
    %v264 = vld [vmem:[#allocation8 + $0x38] sm:$0xff]
    %v265 = vld [vmem:[#allocation8 + $0x40] sm:$0xff]
    %v266 = vld [vmem:[#allocation8 + $0x48] sm:$0xff]
    %v267 = vld [vmem:[#allocation8 + $0x50] sm:$0xff]
    %v268 = vld [vmem:[#allocation8 + $0x58] sm:$0xff]
    %v269 = vld [vmem:[#allocation8 + $0x60] sm:$0xff]
    %v270 = vld [vmem:[#allocation8 + $0x68] sm:$0xff]
    %v271 = vld [vmem:[#allocation8 + $0x70] sm:$0xff]
    %v272 = vld [vmem:[#allocation8 + $0x78] sm:$0xff]
    %v273 = vld [vmem:[#allocation8 + $0x80] sm:$0xff]
    %v274 = vld [vmem:[#allocation8 + $0x88] sm:$0xff]
    %v275 = vld [vmem:[#allocation8 + $0x90] sm:$0xff]
    %v276 = vld [vmem:[#allocation8 + $0x98] sm:$0xff]
    %v277 = vld [vmem:[#allocation8 + $0xa0] sm:$0xff]
    %v278 = vld [vmem:[#allocation8 + $0xa8] sm:$0xff]
    %v279 = vld [vmem:[#allocation8 + $0xb0] sm:$0xff]
    %v280 = vld [vmem:[#allocation8 + $0xb8] sm:$0xff]
    %v281 = vld [vmem:[#allocation8 + $0xc0] sm:$0xff]
    %v282 = vld [vmem:[#allocation8 + $0xc8] sm:$0xff]
    %v283 = vld [vmem:[#allocation8 + $0xd0] sm:$0xff]
    %v284 = vld [vmem:[#allocation8 + $0xd8] sm:$0xff]
    %v285 = vld [vmem:[#allocation8 + $0xe0] sm:$0xff]
    %v286 = vld [vmem:[#allocation8 + $0xe8] sm:$0xff]
    %v287 = vld [vmem:[#allocation8 + $0xf0] sm:$0xff]
    %v288 = vld [vmem:[#allocation8 + $0xf8] sm:$0xff]
    %v289 = vld [vmem:[#allocation8 + $0x100] sm:$0xff]
    %v290 = vld [vmem:[#allocation8 + $0x108] sm:$0xff]
    %v291 = vld [vmem:[#allocation8 + $0x110] sm:$0xff]
    %v292 = vld [vmem:[#allocation8 + $0x118] sm:$0xff]
    %v293 = vld [vmem:[#allocation8 + $0x120] sm:$0xff]
    %v294 = vld [vmem:[#allocation8 + $0x128] sm:$0xff]
    %v295 = vld [vmem:[#allocation8 + $0x130] sm:$0xff]
    %v296 = vld [vmem:[#allocation8 + $0x138] sm:$0xff]
    %v297 = vld [vmem:[#allocation8 + $0x140] sm:$0xff]
    %v298 = vld [vmem:[#allocation8 + $0x148] sm:$0xff]
    %v299 = vld [vmem:[#allocation8 + $0x150] sm:$0xff]
    %v300 = vld [vmem:[#allocation8 + $0x158] sm:$0xff]
    %v301 = vld [vmem:[#allocation8 + $0x160] sm:$0xff]
    %v302 = vld [vmem:[#allocation8 + $0x168] sm:$0xff]
    %v303 = vld [vmem:[#allocation8 + $0x170] sm:$0xff]
    %v304 = vld [vmem:[#allocation8 + $0x178] sm:$0xff]
    %v305 = vld [vmem:[#allocation8 + $0x180] sm:$0xff]
    %v306 = vld [vmem:[#allocation8 + $0x188] sm:$0xff]
    %v307 = vld [vmem:[#allocation8 + $0x190] sm:$0xff]
    %v308 = vld [vmem:[#allocation8 + $0x198] sm:$0xff]
    %v309 = vld [vmem:[#allocation8 + $0x1a0] sm:$0xff]
    %v310 = vld [vmem:[#allocation8 + $0x1a8] sm:$0xff]
    %v311 = vld [vmem:[#allocation8 + $0x1b0] sm:$0xff]
    %v312 = vld [vmem:[#allocation8 + $0x1b8] sm:$0xff]
    %v313 = vld [vmem:[#allocation8 + $0x1c0] sm:$0xff]
    %v314 = vld [vmem:[#allocation8 + $0x1c8] sm:$0xff]
    %v315 = vld [vmem:[#allocation8 + $0x1d0] sm:$0xff]
    %v316 = vld [vmem:[#allocation8 + $0x1d8] sm:$0xff]
    %v317 = vld [vmem:[#allocation8 + $0x1e0] sm:$0xff]
    %v318 = vld [vmem:[#allocation8 + $0x1e8] sm:$0xff]
    %v319 = vld [vmem:[#allocation8 + $0x1f0] sm:$0xff]
    %v320 = vld [vmem:[#allocation8 + $0x1f8] sm:$0xff]
    %v321 = vld [vmem:[%s4] sm:$0x3]
    %v323 = vlaneseq
    %v324 = vshrl.u32 %v323, 7
    %v325 = vsub.s32 0, %v324
    %v326 = vrot.slane %v321, %v325
    %v327 = vlaneseq
    %v328 = vshrl.u32 %v327, 7
    %v329 = vsub.s32 1, %v328
    %v330 = vrot.slane %v321, %v329
    %v397 = vunpack.c.l.b16 %v257
    %v398 = vunpack.c.h.b16 %v257
    %v399 = vunpack.c.l.b16 %v258
    %v400 = vunpack.c.h.b16 %v258
    %v401 = vunpack.c.l.b16 %v259
    %v402 = vunpack.c.h.b16 %v259
    %v403 = vunpack.c.l.b16 %v260
    %v404 = vunpack.c.h.b16 %v260
    %v405 = vunpack.c.l.b16 %v261
    %v406 = vunpack.c.h.b16 %v261
    %v407 = vunpack.c.l.b16 %v262
    %v408 = vunpack.c.h.b16 %v262
    %v409 = vunpack.c.l.b16 %v263
    %v410 = vunpack.c.h.b16 %v263
    %v411 = vunpack.c.l.b16 %v264
    %v412 = vunpack.c.h.b16 %v264
    %v413 = vunpack.c.l.b16 %v265
    %v414 = vunpack.c.h.b16 %v265
    %v415 = vunpack.c.l.b16 %v266
    %v416 = vunpack.c.h.b16 %v266
    %v417 = vunpack.c.l.b16 %v267
    %v418 = vunpack.c.h.b16 %v267
    %v419 = vunpack.c.l.b16 %v268
    %v420 = vunpack.c.h.b16 %v268
    %v421 = vunpack.c.l.b16 %v269
    %v422 = vunpack.c.h.b16 %v269
    %v423 = vunpack.c.l.b16 %v270
    %v424 = vunpack.c.h.b16 %v270
    %v425 = vunpack.c.l.b16 %v271
    %v426 = vunpack.c.h.b16 %v271
    %v427 = vunpack.c.l.b16 %v272
    %v428 = vunpack.c.h.b16 %v272
    %v429 = vunpack.c.l.b16 %v273
    %v430 = vunpack.c.h.b16 %v273
    %v431 = vunpack.c.l.b16 %v274
    %v432 = vunpack.c.h.b16 %v274
    %v433 = vunpack.c.l.b16 %v275
    %v434 = vunpack.c.h.b16 %v275
    %v435 = vunpack.c.l.b16 %v276
    %v436 = vunpack.c.h.b16 %v276
    %v437 = vunpack.c.l.b16 %v277
    %v438 = vunpack.c.h.b16 %v277
    %v439 = vunpack.c.l.b16 %v278
    %v440 = vunpack.c.h.b16 %v278
    %v441 = vunpack.c.l.b16 %v279
    %v442 = vunpack.c.h.b16 %v279
    %v443 = vunpack.c.l.b16 %v280
    %v444 = vunpack.c.h.b16 %v280
    %v445 = vunpack.c.l.b16 %v281
    %v446 = vunpack.c.h.b16 %v281
    %v447 = vunpack.c.l.b16 %v282
    %v448 = vunpack.c.h.b16 %v282
    %v449 = vunpack.c.l.b16 %v283
    %v450 = vunpack.c.h.b16 %v283
    %v451 = vunpack.c.l.b16 %v284
    %v452 = vunpack.c.h.b16 %v284
    %v453 = vunpack.c.l.b16 %v285
    %v454 = vunpack.c.h.b16 %v285
    %v455 = vunpack.c.l.b16 %v286
    %v456 = vunpack.c.h.b16 %v286
    %v457 = vunpack.c.l.b16 %v287
    %v458 = vunpack.c.h.b16 %v287
    %v459 = vunpack.c.l.b16 %v288
    %v460 = vunpack.c.h.b16 %v288
    %v461 = vunpack.c.l.b16 %v289
    %v462 = vunpack.c.h.b16 %v289
    %v463 = vunpack.c.l.b16 %v290
    %v464 = vunpack.c.h.b16 %v290
    %v465 = vunpack.c.l.b16 %v291
    %v466 = vunpack.c.h.b16 %v291
    %v467 = vunpack.c.l.b16 %v292
    %v468 = vunpack.c.h.b16 %v292
    %v469 = vunpack.c.l.b16 %v293
    %v470 = vunpack.c.h.b16 %v293
    %v471 = vunpack.c.l.b16 %v294
    %v472 = vunpack.c.h.b16 %v294
    %v473 = vunpack.c.l.b16 %v295
    %v474 = vunpack.c.h.b16 %v295
    %v475 = vunpack.c.l.b16 %v296
    %v476 = vunpack.c.h.b16 %v296
    %v477 = vunpack.c.l.b16 %v297
    %v478 = vunpack.c.h.b16 %v297
    %v479 = vunpack.c.l.b16 %v298
    %v480 = vunpack.c.h.b16 %v298
    %v481 = vunpack.c.l.b16 %v299
    %v482 = vunpack.c.h.b16 %v299
    %v483 = vunpack.c.l.b16 %v300
    %v484 = vunpack.c.h.b16 %v300
    %v485 = vunpack.c.l.b16 %v301
    %v486 = vunpack.c.h.b16 %v301
    %v487 = vunpack.c.l.b16 %v302
    %v488 = vunpack.c.h.b16 %v302
    %v489 = vunpack.c.l.b16 %v303
    %v490 = vunpack.c.h.b16 %v303
    %v491 = vunpack.c.l.b16 %v304
    %v492 = vunpack.c.h.b16 %v304
    %v493 = vunpack.c.l.b16 %v305
    %v494 = vunpack.c.h.b16 %v305
    %v495 = vunpack.c.l.b16 %v306
    %v496 = vunpack.c.h.b16 %v306
    %v497 = vunpack.c.l.b16 %v307
    %v498 = vunpack.c.h.b16 %v307
    %v499 = vunpack.c.l.b16 %v308
    %v500 = vunpack.c.h.b16 %v308
    %v501 = vunpack.c.l.b16 %v309
    %v502 = vunpack.c.h.b16 %v309
    %v503 = vunpack.c.l.b16 %v310
    %v504 = vunpack.c.h.b16 %v310
    %v505 = vunpack.c.l.b16 %v311
    %v506 = vunpack.c.h.b16 %v311
    %v507 = vunpack.c.l.b16 %v312
    %v508 = vunpack.c.h.b16 %v312
    %v509 = vunpack.c.l.b16 %v313
    %v510 = vunpack.c.h.b16 %v313
    %v511 = vunpack.c.l.b16 %v314
    %v512 = vunpack.c.h.b16 %v314
    %v513 = vunpack.c.l.b16 %v315
    %v514 = vunpack.c.h.b16 %v315
    %v515 = vunpack.c.l.b16 %v316
    %v516 = vunpack.c.h.b16 %v316
    %v517 = vunpack.c.l.b16 %v317
    %v518 = vunpack.c.h.b16 %v317
    %v519 = vunpack.c.l.b16 %v318
    %v520 = vunpack.c.h.b16 %v318
    %v521 = vunpack.c.l.b16 %v319
    %v522 = vunpack.c.h.b16 %v319
    %v523 = vunpack.c.l.b16 %v320
    %v524 = vunpack.c.h.b16 %v320
    %v525 = vpack.c.b16 %v399, %v397
    %v526 = vpack.c.b16 %v400, %v398
    %v527 = vpack.c.b16 %v403, %v401
    %v528 = vpack.c.b16 %v404, %v402
    %v529 = vpack.c.b16 %v407, %v405
    %v530 = vpack.c.b16 %v408, %v406
    %v531 = vpack.c.b16 %v411, %v409
    %v532 = vpack.c.b16 %v412, %v410
    %v533 = vpack.c.b16 %v415, %v413
    %v534 = vpack.c.b16 %v416, %v414
    %v535 = vpack.c.b16 %v419, %v417
    %v536 = vpack.c.b16 %v420, %v418
    %v537 = vpack.c.b16 %v423, %v421
    %v538 = vpack.c.b16 %v424, %v422
    %v539 = vpack.c.b16 %v427, %v425
    %v540 = vpack.c.b16 %v428, %v426
    %v541 = vpack.c.b16 %v431, %v429
    %v542 = vpack.c.b16 %v432, %v430
    %v543 = vpack.c.b16 %v435, %v433
    %v544 = vpack.c.b16 %v436, %v434
    %v545 = vpack.c.b16 %v439, %v437
    %v546 = vpack.c.b16 %v440, %v438
    %v547 = vpack.c.b16 %v443, %v441
    %v548 = vpack.c.b16 %v444, %v442
    %v549 = vpack.c.b16 %v447, %v445
    %v550 = vpack.c.b16 %v448, %v446
    %v551 = vpack.c.b16 %v451, %v449
    %v552 = vpack.c.b16 %v452, %v450
    %v553 = vpack.c.b16 %v455, %v453
    %v554 = vpack.c.b16 %v456, %v454
    %v555 = vpack.c.b16 %v459, %v457
    %v556 = vpack.c.b16 %v460, %v458
    %v557 = vpack.c.b16 %v463, %v461
    %v558 = vpack.c.b16 %v464, %v462
    %v559 = vpack.c.b16 %v467, %v465
    %v560 = vpack.c.b16 %v468, %v466
    %v561 = vpack.c.b16 %v471, %v469
    %v562 = vpack.c.b16 %v472, %v470
    %v563 = vpack.c.b16 %v475, %v473
    %v564 = vpack.c.b16 %v476, %v474
    %v565 = vpack.c.b16 %v479, %v477
    %v566 = vpack.c.b16 %v480, %v478
    %v567 = vpack.c.b16 %v483, %v481
    %v568 = vpack.c.b16 %v484, %v482
    %v569 = vpack.c.b16 %v487, %v485
    %v570 = vpack.c.b16 %v488, %v486
    %v571 = vpack.c.b16 %v491, %v489
    %v572 = vpack.c.b16 %v492, %v490
    %v573 = vpack.c.b16 %v495, %v493
    %v574 = vpack.c.b16 %v496, %v494
    %v575 = vpack.c.b16 %v499, %v497
    %v576 = vpack.c.b16 %v500, %v498
    %v577 = vpack.c.b16 %v503, %v501
    %v578 = vpack.c.b16 %v504, %v502
    %v579 = vpack.c.b16 %v507, %v505
    %v580 = vpack.c.b16 %v508, %v506
    %v581 = vpack.c.b16 %v511, %v509
    %v582 = vpack.c.b16 %v512, %v510
    %v583 = vpack.c.b16 %v515, %v513
    %v584 = vpack.c.b16 %v516, %v514
    %v585 = vpack.c.b16 %v519, %v517
    %v586 = vpack.c.b16 %v520, %v518
    %v587 = vpack.c.b16 %v523, %v521
    %v588 = vpack.c.b16 %v524, %v522
    %653 = vmatprep.subr.bf16.mxu0 %v540
    %654 = vmatpush1.bf16.msra.mxu0 %v539
    %655 = vmatprep.subr.bf16.mxu0 %v538
    %656 = vmatpush1.bf16.msra.mxu0 %v537
    %657 = vmatprep.subr.bf16.mxu0 %v536
    %658 = vmatpush1.bf16.msra.mxu0 %v535
    %659 = vmatprep.subr.bf16.mxu0 %v534
    %660 = vmatpush1.bf16.msra.mxu0 %v533
    %661 = vmatprep.subr.bf16.mxu0 %v532
    %662 = vmatpush1.bf16.msra.mxu0 %v531
    %663 = vmatprep.subr.bf16.mxu0 %v530
    %664 = vmatpush1.bf16.msra.mxu0 %v529
    %665 = vmatprep.subr.bf16.mxu0 %v528
    %666 = vmatpush1.bf16.msra.mxu0 %v527
    %667 = vmatprep.subr.bf16.mxu0 %v526
    %668 = vmatpush1.bf16.msra.mxu0 %v525
    %669 = vmatprep.subr.bf16.mxu0 %v556
    %670 = vmatpush2.bf16.msra.mxu0 %v555
    %671 = vmatprep.subr.bf16.mxu0 %v554
    %672 = vmatpush2.bf16.msra.mxu0 %v553
    %673 = vmatprep.subr.bf16.mxu0 %v552
    %674 = vmatpush2.bf16.msra.mxu0 %v551
    %675 = vmatprep.subr.bf16.mxu0 %v550
    %676 = vmatpush2.bf16.msra.mxu0 %v549
    %677 = vmatprep.subr.bf16.mxu0 %v548
    %678 = vmatpush2.bf16.msra.mxu0 %v547
    %679 = vmatprep.subr.bf16.mxu0 %v546
    %680 = vmatpush2.bf16.msra.mxu0 %v545
    %681 = vmatprep.subr.bf16.mxu0 %v544
    %682 = vmatpush2.bf16.msra.mxu0 %v543
    %683 = vmatprep.subr.bf16.mxu0 %v542
    %684 = vmatpush2.bf16.msra.mxu0 %v541
    %685 = vmatprep.mubr.bf16.mxu0 %v254
    %686 = vmatmul.mubr.bf16.gmra.mxu0 %v253
    %v687 = vpop.f32.mrf.mxu0
    %v688 = vadd.f32 %v326, %v687
    %v689 = vpop.f32.mrf.mxu0
    %v690 = vadd.f32 %v330, %v689
    %v691 = vpop.f32.mrf.mxu0
    %v692 = vpop.f32.mrf.mxu0
    %693 = vdwg.mxu0
    %694 = vmatprep.subr.bf16.mxu0 %v572
    %695 = vmatpush1.bf16.msra.mxu0 %v571
    %696 = vmatprep.subr.bf16.mxu0 %v570
    %697 = vmatpush1.bf16.msra.mxu0 %v569
    %698 = vmatprep.subr.bf16.mxu0 %v568
    %699 = vmatpush1.bf16.msra.mxu0 %v567
    %700 = vmatprep.subr.bf16.mxu0 %v566
    %701 = vmatpush1.bf16.msra.mxu0 %v565
    %702 = vmatprep.subr.bf16.mxu0 %v564
    %703 = vmatpush1.bf16.msra.mxu0 %v563
    %704 = vmatprep.subr.bf16.mxu0 %v562
    %705 = vmatpush1.bf16.msra.mxu0 %v561
    %706 = vmatprep.subr.bf16.mxu0 %v560
    %707 = vmatpush1.bf16.msra.mxu0 %v559
    %708 = vmatprep.subr.bf16.mxu0 %v558
    %709 = vmatpush1.bf16.msra.mxu0 %v557
    %710 = vmatprep.subr.bf16.mxu0 %v588
    %711 = vmatpush2.bf16.msra.mxu0 %v587
    %712 = vmatprep.subr.bf16.mxu0 %v586
    %713 = vmatpush2.bf16.msra.mxu0 %v585
    %714 = vmatprep.subr.bf16.mxu0 %v584
    %715 = vmatpush2.bf16.msra.mxu0 %v583
    %716 = vmatprep.subr.bf16.mxu0 %v582
    %717 = vmatpush2.bf16.msra.mxu0 %v581
    %718 = vmatprep.subr.bf16.mxu0 %v580
    %719 = vmatpush2.bf16.msra.mxu0 %v579
    %720 = vmatprep.subr.bf16.mxu0 %v578
    %721 = vmatpush2.bf16.msra.mxu0 %v577
    %722 = vmatprep.subr.bf16.mxu0 %v576
    %723 = vmatpush2.bf16.msra.mxu0 %v575
    %724 = vmatprep.subr.bf16.mxu0 %v574
    %725 = vmatpush2.bf16.msra.mxu0 %v573
    %726 = vmatprep.mubr.bf16.mxu0 %v256
    %727 = vmatmul.mubr.bf16.gmra.mxu0 %v255
    %v728 = vpop.f32.mrf.mxu0
    %v729 = vadd.f32 %v688, %v728
    %v730 = vpop.f32.mrf.mxu0
    %v731 = vadd.f32 %v690, %v730
    %v732 = vpop.f32.mrf.mxu0
    %v733 = vpop.f32.mrf.mxu0
    %734 = vdwg.mxu0
    %v735 = vmax.f32 %v729, 0.0
    %v736 = vmax.f32 %v731, 0.0
    %v737 = vpack.c.bf16 %v735, %v735
    %v738 = vpack.c.bf16 %v736, %v736
    %v739 = vld [vmem:[#allocation10] sm:$0xf]
    %v740 = vld [vmem:[#allocation10 + $0x4] sm:$0xf]
    %v741 = vld [vmem:[#allocation10 + $0x8] sm:$0xf]
    %v742 = vld [vmem:[#allocation10 + $0xc] sm:$0xf]
    %v743 = vld [vmem:[#allocation10 + $0x10] sm:$0xf]
    %v744 = vld [vmem:[#allocation10 + $0x14] sm:$0xf]
    %v745 = vld [vmem:[#allocation10 + $0x18] sm:$0xf]
    %v746 = vld [vmem:[#allocation10 + $0x1c] sm:$0xf]
    %v747 = vld [vmem:[#allocation10 + $0x20] sm:$0xf]
    %v748 = vld [vmem:[#allocation10 + $0x24] sm:$0xf]
    %v749 = vld [vmem:[#allocation10 + $0x28] sm:$0xf]
    %v750 = vld [vmem:[#allocation10 + $0x2c] sm:$0xf]
    %v751 = vld [vmem:[#allocation10 + $0x30] sm:$0xf]
    %v752 = vld [vmem:[#allocation10 + $0x34] sm:$0xf]
    %v753 = vld [vmem:[#allocation10 + $0x38] sm:$0xf]
    %v754 = vld [vmem:[#allocation10 + $0x3c] sm:$0xf]
    %v755 = vld [vmem:[#allocation10 + $0x40] sm:$0xf]
    %v756 = vld [vmem:[#allocation10 + $0x44] sm:$0xf]
    %v757 = vld [vmem:[#allocation10 + $0x48] sm:$0xf]
    %v758 = vld [vmem:[#allocation10 + $0x4c] sm:$0xf]
    %v759 = vld [vmem:[#allocation10 + $0x50] sm:$0xf]
    %v760 = vld [vmem:[#allocation10 + $0x54] sm:$0xf]
    %v761 = vld [vmem:[#allocation10 + $0x58] sm:$0xf]
    %v762 = vld [vmem:[#allocation10 + $0x5c] sm:$0xf]
    %v763 = vld [vmem:[#allocation10 + $0x60] sm:$0xf]
    %v764 = vld [vmem:[#allocation10 + $0x64] sm:$0xf]
    %v765 = vld [vmem:[#allocation10 + $0x68] sm:$0xf]
    %v766 = vld [vmem:[#allocation10 + $0x6c] sm:$0xf]
    %v767 = vld [vmem:[#allocation10 + $0x70] sm:$0xf]
    %v768 = vld [vmem:[#allocation10 + $0x74] sm:$0xf]
    %v769 = vld [vmem:[#allocation10 + $0x78] sm:$0xf]
    %v770 = vld [vmem:[#allocation10 + $0x7c] sm:$0xf]
    %v771 = vld [vmem:[%s6] sm:$0x1]
    %v773 = vlaneseq
    %v774 = vshrl.u32 %v773, 7
    %v775 = vsub.s32 0, %v774
    %v776 = vrot.slane %v771, %v775
    %v810 = vunpack.c.l.b16 %v739
    %v811 = vunpack.c.l.b16 %v740
    %v812 = vunpack.c.l.b16 %v741
    %v813 = vunpack.c.l.b16 %v742
    %v814 = vunpack.c.l.b16 %v743
    %v815 = vunpack.c.l.b16 %v744
    %v816 = vunpack.c.l.b16 %v745
    %v817 = vunpack.c.l.b16 %v746
    %v818 = vunpack.c.l.b16 %v747
    %v819 = vunpack.c.l.b16 %v748
    %v820 = vunpack.c.l.b16 %v749
    %v821 = vunpack.c.l.b16 %v750
    %v822 = vunpack.c.l.b16 %v751
    %v823 = vunpack.c.l.b16 %v752
    %v824 = vunpack.c.l.b16 %v753
    %v825 = vunpack.c.l.b16 %v754
    %v826 = vunpack.c.l.b16 %v755
    %v827 = vunpack.c.l.b16 %v756
    %v828 = vunpack.c.l.b16 %v757
    %v829 = vunpack.c.l.b16 %v758
    %v830 = vunpack.c.l.b16 %v759
    %v831 = vunpack.c.l.b16 %v760
    %v832 = vunpack.c.l.b16 %v761
    %v833 = vunpack.c.l.b16 %v762
    %v834 = vunpack.c.l.b16 %v763
    %v835 = vunpack.c.l.b16 %v764
    %v836 = vunpack.c.l.b16 %v765
    %v837 = vunpack.c.l.b16 %v766
    %v838 = vunpack.c.l.b16 %v767
    %v839 = vunpack.c.l.b16 %v768
    %v840 = vunpack.c.l.b16 %v769
    %v841 = vunpack.c.l.b16 %v770
    %v842 = vpack.c.b16 %v811, %v810
    %v843 = vpack.c.b16 %v813, %v812
    %v844 = vpack.c.b16 %v815, %v814
    %v845 = vpack.c.b16 %v817, %v816
    %v846 = vpack.c.b16 %v819, %v818
    %v847 = vpack.c.b16 %v821, %v820
    %v848 = vpack.c.b16 %v823, %v822
    %v849 = vpack.c.b16 %v825, %v824
    %v850 = vpack.c.b16 %v827, %v826
    %v851 = vpack.c.b16 %v829, %v828
    %v852 = vpack.c.b16 %v831, %v830
    %v853 = vpack.c.b16 %v833, %v832
    %v854 = vpack.c.b16 %v835, %v834
    %v855 = vpack.c.b16 %v837, %v836
    %v856 = vpack.c.b16 %v839, %v838
    %v857 = vpack.c.b16 %v841, %v840
    %874 = vmatprep.subr.bf16.mxu0 0
    %875 = vmatpush1.bf16.msra.mxu0 %v849
    %876 = vmatprep.subr.bf16.mxu0 0
    %877 = vmatpush1.bf16.msra.mxu0 %v848
    %878 = vmatprep.subr.bf16.mxu0 0
    %879 = vmatpush1.bf16.msra.mxu0 %v847
    %880 = vmatprep.subr.bf16.mxu0 0
    %881 = vmatpush1.bf16.msra.mxu0 %v846
    %882 = vmatprep.subr.bf16.mxu0 0
    %883 = vmatpush1.bf16.msra.mxu0 %v845
    %884 = vmatprep.subr.bf16.mxu0 0
    %885 = vmatpush1.bf16.msra.mxu0 %v844
    %886 = vmatprep.subr.bf16.mxu0 0
    %887 = vmatpush1.bf16.msra.mxu0 %v843
    %888 = vmatprep.subr.bf16.mxu0 0
    %889 = vmatpush1.bf16.msra.mxu0 %v842
    %890 = vmatprep.subr.bf16.mxu0 0
    %891 = vmatpush2.bf16.msra.mxu0 %v857
    %892 = vmatprep.subr.bf16.mxu0 0
    %893 = vmatpush2.bf16.msra.mxu0 %v856
    %894 = vmatprep.subr.bf16.mxu0 0
    %895 = vmatpush2.bf16.msra.mxu0 %v855
    %896 = vmatprep.subr.bf16.mxu0 0
    %897 = vmatpush2.bf16.msra.mxu0 %v854
    %898 = vmatprep.subr.bf16.mxu0 0
    %899 = vmatpush2.bf16.msra.mxu0 %v853
    %900 = vmatprep.subr.bf16.mxu0 0
    %901 = vmatpush2.bf16.msra.mxu0 %v852
    %902 = vmatprep.subr.bf16.mxu0 0
    %903 = vmatpush2.bf16.msra.mxu0 %v851
    %904 = vmatprep.subr.bf16.mxu0 0
    %905 = vmatpush2.bf16.msra.mxu0 %v850
    %906 = vmatprep.mubr.bf16.mxu0 %v738
    %907 = vmatmul.mubr.bf16.gmra.mxu0 %v737
    %v908 = vpop.f32.mrf.mxu0
    %v909 = vadd.f32 %v776, %v908
    %v910 = vpop.f32.mrf.mxu0
    %v911 = vpop.f32.mrf.mxu0
    %v912 = vpop.f32.mrf.mxu0
    %913 = vdwg.mxu0
    %914 = vst [vmem:[#allocation11] sm:$0xff] %v909
    // Predicated region
    $region50: #{tpu_custom_call.1} parent=1 // pred_check
      _
    $region51: #{tpu_custom_call.1} parent=1 // pred_check_branch
      %916 = sbr.rel (0) target = $region53
    $region52: #{tpu_custom_call.1} parent=1 // pred_region
      %s918 = ssub.s32 128, 128
      %919 = vsyncadd [#allocation4], %s918
      %s921 = sshll.u32 [#allocation11], 4
      %s922 = int_to_ptr.vmem [resolvable:$true] %s921
      %924 = dma.vmem_to_hbm [thread:$0]  %s922, 128, %s7, [#allocation4]
    $region53: #{tpu_custom_call.1} parent=1 // pred_fallthru
      _
    // Predicated region
    $region54: #{tpu_custom_call.1} parent=1 // pred_check
      _
    $region55: #{tpu_custom_call.1} parent=1 // pred_check_branch
      %926 = sbr.rel (0) target = $region57
    $region56: #{tpu_custom_call.1} parent=1 // pred_region
      %927 = dma.done [#allocation4], 128
    $region57: #{tpu_custom_call.1} parent=1 // pred_fallthru
      _
    %928 = vsyncpa [#allocation3], 1
    %929 = vsyncpa [#allocation6], 1
    %930 = vsyncpa [#allocation9], 1
    %931 = vsyncpa [#allocation4], 1

</llo_original>
